<compile_context>
chip_gen: v5e
topology: v5e:2x2
jax: 0.10.0
libtpu: 0.0.40
codegen_flags: <defaults>
</compile_context>

<pallas_src>
import jax
import jax.numpy as jnp
from jax import lax
from jax.experimental import pallas as pl
from jax.experimental.pallas import tpu as pltpu

_LANE = 1024            # lane-dense last dim (multiple of 128)
_MAX_BLOCK_ROWS = 256   # (256, 1024) f32 tile = 1 MiB per pipeline buffer
_SQRT2 = 1.4142135623730951


def _fmix32(x):
    """murmur3 finalizer: uint32 -> uint32 with full avalanche."""
    x = x ^ (x >> jnp.uint32(16))
    x = x * jnp.uint32(0x85EBCA6B)
    x = x ^ (x >> jnp.uint32(13))
    x = x * jnp.uint32(0xC2B2AE35)
    x = x ^ (x >> jnp.uint32(16))
    return x


def _erfinv_f32(x):
    """Single-precision erfinv polynomial (Giles 2010), valid for |x| < 1."""
    w = -jnp.log((1.0 - x) * (1.0 + x))
    # central branch (w < 5)
    wc = w - 2.5
    pc = 2.81022636e-08
    pc = 3.43273939e-07 + pc * wc
    pc = -3.5233877e-06 + pc * wc
    pc = -4.39150654e-06 + pc * wc
    pc = 0.00021858087 + pc * wc
    pc = -0.00125372503 + pc * wc
    pc = -0.00417768164 + pc * wc
    pc = 0.246640727 + pc * wc
    pc = 1.50140941 + pc * wc
    # tail branch (w >= 5)
    wt = jnp.sqrt(w) - 3.0
    pt = -0.000200214257
    pt = 0.000100950558 + pt * wt
    pt = 0.00134934322 + pt * wt
    pt = -0.00367342844 + pt * wt
    pt = 0.00573950773 + pt * wt
    pt = -0.0076224613 + pt * wt
    pt = 0.00943887047 + pt * wt
    pt = 1.00167406 + pt * wt
    pt = 2.83297682 + pt * wt
    p = jnp.where(w < 5.0, pc, pt)
    return p * x


def _gaussian_noise_kernel(seed_ref, std_ref, x_ref, o_ref):
    # seed_ref / std_ref: (1,) scalars in SMEM; x_ref / o_ref: VMEM tiles.
    rows, lanes = x_ref.shape

    # Globally-unique per-element counter; fold in the grid position so every
    # tile gets independent noise (not byte-identical per-tile draws).
    row_ids = lax.broadcasted_iota(jnp.int32, (rows, lanes), 0)
    col_ids = lax.broadcasted_iota(jnp.int32, (rows, lanes), 1)
    elem = (row_ids * lanes + col_ids).astype(jnp.uint32)

    seed = seed_ref[0].astype(jnp.uint32)
    tile = lax.convert_element_type(pl.program_id(0), jnp.uint32)
    salt = (seed * jnp.uint32(0x9E3779B9)
            + tile * jnp.uint32(rows * lanes)
            + jnp.uint32(0x7F4A7C15))

    bits = _fmix32(elem + salt)

    # 23 random bits -> uniform strictly inside (0, 1) -> (-1, 1) -> N(0, 1).
    m = (bits >> jnp.uint32(9)).astype(jnp.int32).astype(jnp.float32)
    u = (m + 0.5) * (1.0 / (1 << 23))
    noise = _SQRT2 * _erfinv_f32(2.0 * u - 1.0)

    std = std_ref[0]
    o_ref[...] = (x_ref[...] + noise * std).astype(o_ref.dtype)


def gaussian_noise(din, stddev, *, seed=0, training=True):
    """JAX/Pallas equivalent of GaussianNoise.forward.

    din:      float array, any shape (e.g. NCHW)
    stddev:   scalar noise scale
    seed:     int PRNG seed
    training: if False, identity (eval mode).
    """
    # TODO(synk): PyTorch advances its global RNG state implicitly; here the
    # caller must pass a fresh `seed` each training step to get new noise.
    if not training:
        return din

    orig_shape = din.shape
    orig_dtype = din.dtype
    total = din.size

    flat = din.reshape(-1).astype(jnp.float32)

    rows = pl.cdiv(total, _LANE)
    block_rows = _MAX_BLOCK_ROWS if rows >= _MAX_BLOCK_ROWS else rows
    padded_rows = pl.cdiv(rows, block_rows) * block_rows
    padded_total = padded_rows * _LANE
    if padded_total != total:
        flat = jnp.pad(flat, (0, padded_total - total))
    x2d = flat.reshape(padded_rows, _LANE)

    seed_arr = jnp.asarray([seed], dtype=jnp.int32)
    std_arr = jnp.asarray([stddev], dtype=jnp.float32)

    out2d = pl.pallas_call(
        _gaussian_noise_kernel,
        out_shape=jax.ShapeDtypeStruct(x2d.shape, x2d.dtype),
        grid=(padded_rows // block_rows,),
        in_specs=[
            pl.BlockSpec(memory_space=pltpu.MemorySpace.SMEM),    # seed
            pl.BlockSpec(memory_space=pltpu.MemorySpace.SMEM),    # stddev
            pl.BlockSpec((block_rows, _LANE), lambda i: (i, 0)),  # din tile
        ],
        out_specs=pl.BlockSpec((block_rows, _LANE), lambda i: (i, 0)),
        input_output_aliases={2: 0},  # pure read-modify-write of din
        compiler_params=pltpu.CompilerParams(
            dimension_semantics=("parallel",),   # v7x: shard tiles across TCs
            vmem_limit_bytes=32 * 1024 * 1024,
        ),
    )(seed_arr, std_arr, x2d)

    out = out2d.reshape(-1)[:total].reshape(orig_shape)
    return out.astype(orig_dtype)


if __name__ == "__main__":
    key = jax.random.PRNGKey(0)
    x = jax.random.normal(key, (2, 4, 16, 16), dtype=jnp.float32)
    stddev = 0.1

    # training mode: din + noise * stddev (noise generated in-kernel)
    y_train = jax.block_until_ready(gaussian_noise(x, stddev, seed=123, training=True))
    assert y_train.shape == x.shape and y_train.dtype == x.dtype

    delta = y_train - x
    assert float(jnp.max(jnp.abs(delta))) > 0.0
    assert float(jnp.mean(jnp.abs(delta))) < 1.0
    # the injected noise should have std close to stddev
    emp_std = float(jnp.std(delta))
    assert 0.03 < emp_std < 0.3, emp_std

    # eval mode: identity
    y_eval = jax.block_until_ready(gaussian_noise(x, stddev, training=False))
    assert bool(jnp.all(y_eval == x))

    print("KERNEL_OK")
</pallas_src>

<mosaic_0001>
module attributes {stable_mosaic.version = 11 : i64} {
  func.func @_gaussian_noise_kernel(%arg0: i32, %arg1: memref<1xi32, #tpu.memory_space<smem>>, %arg2: memref<1xf32, #tpu.memory_space<smem>>, %arg3: memref<2x1024xf32, #tpu.memory_space<vmem>>, %arg4: memref<2x1024xf32, #tpu.memory_space<vmem>>) attributes {dimension_semantics = [#tpu.dimension_semantics<parallel>], iteration_bounds = array<i64: 1>, scalar_prefetch = 0 : i64, scratch_operands = 0 : i64, tpu.core_type = #tpu.core_type<tc>, window_params = [{transform_indices = @transform_0, window_bounds = array<i64: 1>}, {transform_indices = @transform_1, window_bounds = array<i64: 1>}, {transform_indices = @transform_2, window_bounds = array<i64: 2, 1024>}, {transform_indices = @transform_3, window_bounds = array<i64: 2, 1024>}]} {
    %0 = tpu.iota {dimensions = array<i32: 0>} : vector<2x1024xi32>
    %1 = tpu.iota {dimensions = array<i32: 1>} : vector<2x1024xi32>
    %c1024_i32 = arith.constant 1024 : i32
    %2 = vector.broadcast %c1024_i32 : i32 to vector<2x1024xi32>
    %3 = arith.muli %0, %2 : vector<2x1024xi32>
    %4 = arith.addi %3, %1 : vector<2x1024xi32>
    %c0 = arith.constant 0 : index
    %5 = memref.load %arg1[%c0] : memref<1xi32, #tpu.memory_space<smem>>
    %c-1640531527_i32 = arith.constant -1640531527 : i32
    %6 = arith.muli %5, %c-1640531527_i32 : i32
    %c2048_i32 = arith.constant 2048 : i32
    %7 = arith.muli %arg0, %c2048_i32 : i32
    %8 = arith.addi %6, %7 : i32
    %c2135587861_i32 = arith.constant 2135587861 : i32
    %9 = arith.addi %8, %c2135587861_i32 : i32
    %10 = vector.broadcast %9 : i32 to vector<2x1024xi32>
    %11 = arith.addi %4, %10 : vector<2x1024xi32>
    %c16_i32 = arith.constant 16 : i32
    %12 = vector.broadcast %c16_i32 : i32 to vector<2x1024xi32>
    %13 = arith.shrui %11, %12 : vector<2x1024xi32>
    %14 = arith.xori %11, %13 : vector<2x1024xi32>
    %c-2048144789_i32 = arith.constant -2048144789 : i32
    %15 = vector.broadcast %c-2048144789_i32 : i32 to vector<2x1024xi32>
    %16 = arith.muli %14, %15 : vector<2x1024xi32>
    %c13_i32 = arith.constant 13 : i32
    %17 = vector.broadcast %c13_i32 : i32 to vector<2x1024xi32>
    %18 = arith.shrui %16, %17 : vector<2x1024xi32>
    %19 = arith.xori %16, %18 : vector<2x1024xi32>
    %c-1028477387_i32 = arith.constant -1028477387 : i32
    %20 = vector.broadcast %c-1028477387_i32 : i32 to vector<2x1024xi32>
    %21 = arith.muli %19, %20 : vector<2x1024xi32>
    %c16_i32_0 = arith.constant 16 : i32
    %22 = vector.broadcast %c16_i32_0 : i32 to vector<2x1024xi32>
    %23 = arith.shrui %21, %22 : vector<2x1024xi32>
    %24 = arith.xori %21, %23 : vector<2x1024xi32>
    %c9_i32 = arith.constant 9 : i32
    %25 = vector.broadcast %c9_i32 : i32 to vector<2x1024xi32>
    %26 = arith.shrui %24, %25 : vector<2x1024xi32>
    %27 = arith.sitofp %26 : vector<2x1024xi32> to vector<2x1024xf32>
    %cst = arith.constant 5.000000e-01 : f32
    %28 = vector.broadcast %cst : f32 to vector<2x1024xf32>
    %29 = arith.addf %27, %28 : vector<2x1024xf32>
    %cst_1 = arith.constant 1.1920929E-7 : f32
    %30 = vector.broadcast %cst_1 : f32 to vector<2x1024xf32>
    %31 = arith.mulf %29, %30 : vector<2x1024xf32>
    %cst_2 = arith.constant 2.000000e+00 : f32
    %32 = vector.broadcast %cst_2 : f32 to vector<2x1024xf32>
    %33 = arith.mulf %32, %31 : vector<2x1024xf32>
    %cst_3 = arith.constant 1.000000e+00 : f32
    %34 = vector.broadcast %cst_3 : f32 to vector<2x1024xf32>
    %35 = arith.subf %33, %34 : vector<2x1024xf32>
    %cst_4 = arith.constant 1.000000e+00 : f32
    %36 = vector.broadcast %cst_4 : f32 to vector<2x1024xf32>
    %37 = arith.subf %36, %35 : vector<2x1024xf32>
    %cst_5 = arith.constant 1.000000e+00 : f32
    %38 = vector.broadcast %cst_5 : f32 to vector<2x1024xf32>
    %39 = arith.addf %38, %35 : vector<2x1024xf32>
    %40 = arith.mulf %37, %39 : vector<2x1024xf32>
    %41 = math.log %40 : vector<2x1024xf32>
    %cst_6 = arith.constant 0.000000e+00 : f32
    %42 = vector.broadcast %cst_6 : f32 to vector<2x1024xf32>
    %43 = arith.subf %42, %41 : vector<2x1024xf32>
    %cst_7 = arith.constant 2.500000e+00 : f32
    %44 = vector.broadcast %cst_7 : f32 to vector<2x1024xf32>
    %45 = arith.subf %43, %44 : vector<2x1024xf32>
    %cst_8 = arith.constant 2.81022636E-8 : f32
    %46 = vector.broadcast %cst_8 : f32 to vector<2x1024xf32>
    %47 = arith.mulf %46, %45 : vector<2x1024xf32>
    %cst_9 = arith.constant 3.43273939E-7 : f32
    %48 = vector.broadcast %cst_9 : f32 to vector<2x1024xf32>
    %49 = arith.addf %48, %47 : vector<2x1024xf32>
    %50 = arith.mulf %49, %45 : vector<2x1024xf32>
    %cst_10 = arith.constant -3.5233877E-6 : f32
    %51 = vector.broadcast %cst_10 : f32 to vector<2x1024xf32>
    %52 = arith.addf %51, %50 : vector<2x1024xf32>
    %53 = arith.mulf %52, %45 : vector<2x1024xf32>
    %cst_11 = arith.constant -4.39150654E-6 : f32
    %54 = vector.broadcast %cst_11 : f32 to vector<2x1024xf32>
    %55 = arith.addf %54, %53 : vector<2x1024xf32>
    %56 = arith.mulf %55, %45 : vector<2x1024xf32>
    %cst_12 = arith.constant 2.1858087E-4 : f32
    %57 = vector.broadcast %cst_12 : f32 to vector<2x1024xf32>
    %58 = arith.addf %57, %56 : vector<2x1024xf32>
    %59 = arith.mulf %58, %45 : vector<2x1024xf32>
    %cst_13 = arith.constant -0.00125372503 : f32
    %60 = vector.broadcast %cst_13 : f32 to vector<2x1024xf32>
    %61 = arith.addf %60, %59 : vector<2x1024xf32>
    %62 = arith.mulf %61, %45 : vector<2x1024xf32>
    %cst_14 = arith.constant -0.00417768164 : f32
    %63 = vector.broadcast %cst_14 : f32 to vector<2x1024xf32>
    %64 = arith.addf %63, %62 : vector<2x1024xf32>
    %65 = arith.mulf %64, %45 : vector<2x1024xf32>
    %cst_15 = arith.constant 0.246640727 : f32
    %66 = vector.broadcast %cst_15 : f32 to vector<2x1024xf32>
    %67 = arith.addf %66, %65 : vector<2x1024xf32>
    %68 = arith.mulf %67, %45 : vector<2x1024xf32>
    %cst_16 = arith.constant 1.50140941 : f32
    %69 = vector.broadcast %cst_16 : f32 to vector<2x1024xf32>
    %70 = arith.addf %69, %68 : vector<2x1024xf32>
    %71 = math.sqrt %43 : vector<2x1024xf32>
    %cst_17 = arith.constant 3.000000e+00 : f32
    %72 = vector.broadcast %cst_17 : f32 to vector<2x1024xf32>
    %73 = arith.subf %71, %72 : vector<2x1024xf32>
    %cst_18 = arith.constant -2.00214257E-4 : f32
    %74 = vector.broadcast %cst_18 : f32 to vector<2x1024xf32>
    %75 = arith.mulf %74, %73 : vector<2x1024xf32>
    %cst_19 = arith.constant 1.00950558E-4 : f32
    %76 = vector.broadcast %cst_19 : f32 to vector<2x1024xf32>
    %77 = arith.addf %76, %75 : vector<2x1024xf32>
    %78 = arith.mulf %77, %73 : vector<2x1024xf32>
    %cst_20 = arith.constant 0.00134934322 : f32
    %79 = vector.broadcast %cst_20 : f32 to vector<2x1024xf32>
    %80 = arith.addf %79, %78 : vector<2x1024xf32>
    %81 = arith.mulf %80, %73 : vector<2x1024xf32>
    %cst_21 = arith.constant -0.00367342844 : f32
    %82 = vector.broadcast %cst_21 : f32 to vector<2x1024xf32>
    %83 = arith.addf %82, %81 : vector<2x1024xf32>
    %84 = arith.mulf %83, %73 : vector<2x1024xf32>
    %cst_22 = arith.constant 0.00573950773 : f32
    %85 = vector.broadcast %cst_22 : f32 to vector<2x1024xf32>
    %86 = arith.addf %85, %84 : vector<2x1024xf32>
    %87 = arith.mulf %86, %73 : vector<2x1024xf32>
    %cst_23 = arith.constant -0.0076224613 : f32
    %88 = vector.broadcast %cst_23 : f32 to vector<2x1024xf32>
    %89 = arith.addf %88, %87 : vector<2x1024xf32>
    %90 = arith.mulf %89, %73 : vector<2x1024xf32>
    %cst_24 = arith.constant 0.00943887047 : f32
    %91 = vector.broadcast %cst_24 : f32 to vector<2x1024xf32>
    %92 = arith.addf %91, %90 : vector<2x1024xf32>
    %93 = arith.mulf %92, %73 : vector<2x1024xf32>
    %cst_25 = arith.constant 1.00167406 : f32
    %94 = vector.broadcast %cst_25 : f32 to vector<2x1024xf32>
    %95 = arith.addf %94, %93 : vector<2x1024xf32>
    %96 = arith.mulf %95, %73 : vector<2x1024xf32>
    %cst_26 = arith.constant 2.83297682 : f32
    %97 = vector.broadcast %cst_26 : f32 to vector<2x1024xf32>
    %98 = arith.addf %97, %96 : vector<2x1024xf32>
    %cst_27 = arith.constant 5.000000e+00 : f32
    %99 = vector.broadcast %cst_27 : f32 to vector<2x1024xf32>
    %100 = arith.cmpf olt, %43, %99 : vector<2x1024xf32>
    %101 = arith.select %100, %70, %98 : vector<2x1024xi1>, vector<2x1024xf32>
    %102 = arith.mulf %101, %35 : vector<2x1024xf32>
    %cst_28 = arith.constant 1.41421354 : f32
    %103 = vector.broadcast %cst_28 : f32 to vector<2x1024xf32>
    %104 = arith.mulf %103, %102 : vector<2x1024xf32>
    %c0_29 = arith.constant 0 : index
    %105 = memref.load %arg2[%c0_29] : memref<1xf32, #tpu.memory_space<smem>>
    %c0_30 = arith.constant 0 : index
    %c0_31 = arith.constant 0 : index
    %106 = vector.load %arg3[%c0_30, %c0_31] : memref<2x1024xf32, #tpu.memory_space<vmem>>, vector<2x1024xf32>
    %107 = vector.broadcast %105 : f32 to vector<2x1024xf32>
    %108 = arith.mulf %104, %107 : vector<2x1024xf32>
    %109 = arith.addf %106, %108 : vector<2x1024xf32>
    %c0_32 = arith.constant 0 : index
    %c0_33 = arith.constant 0 : index
    %110 = vector.load %arg4[%c0_32, %c0_33] : memref<2x1024xf32, #tpu.memory_space<vmem>>, vector<2x1024xf32>
    tpu.vector_store %arg4[%c0_32, %c0_33], %109 {strides = array<i32>} : memref<2x1024xf32, #tpu.memory_space<vmem>>, vector<2x1024xf32>,
    return
  }
  func.func @transform_0(%arg0: i32) -> i32 {
    %c0_i32 = arith.constant 0 : i32
    %c0_i32_0 = arith.constant 0 : i32
    return %c0_i32 : i32
  }
  func.func @transform_1(%arg0: i32) -> i32 {
    %c0_i32 = arith.constant 0 : i32
    %c0_i32_0 = arith.constant 0 : i32
    return %c0_i32 : i32
  }
  func.func @transform_2(%arg0: i32) -> (i32, i32) {
    %c0_i32 = arith.constant 0 : i32
    %c0_i32_0 = arith.constant 0 : i32
    return %arg0, %c0_i32 : i32, i32
  }
  func.func @transform_3(%arg0: i32) -> (i32, i32) {
    %c0_i32 = arith.constant 0 : i32
    %c0_i32_0 = arith.constant 0 : i32
    return %arg0, %c0_i32 : i32, i32
  }
}

</mosaic_0001>

<llo_original>
// kernel: tpu_custom_call.1
$region0: #{tpu_custom_call.1}
  #allocation0 [shape = 'u32[]', space=smem, size = 0x4, offset = 0x4, fixed_abs, tag = 'smem constant byte address 0x4 - core index']
  #allocation1 [shape = 'u32[72,128]{1,0:T(1,128)}', space=vmem, size = 0x9000, scoped, tag = 'internal scratch']
  #allocation2 [shape = 's32[1]{0:T(128)S(6)}', space=smem, size = 0x200, scoped, tag = 'scoped memory for tpu_custom_call.1']
  #allocation3 [shape = 'f32[1]{0:T(128)S(6)}', space=smem, size = 0x200, scoped, tag = 'scoped memory for tpu_custom_call.1']
  %s0 = inlined_call_operand.<no memory space> [shape: s32[1], index: 0, kind: input, shape index: {}]
  %s1 = inlined_call_operand.<no memory space> [shape: f32[1], index: 1, kind: input, shape index: {}]
  %s2 = inlined_call_operand.hbm [shape: f32[2,1024], index: 2, kind: input, shape index: {}, may-alias: {2,3}]
  %s3 = inlined_call_operand.hbm [shape: f32[2,1024], index: 3, kind: output, shape index: {}, may-alias: {2,3}]
  %s4 = sld [smem:[#allocation0]]
  $region26: #{tpu_custom_call.1} parent=0
    _
  %s6 = ssub.s32 1, %s4
  %s7 = scalar_select 0, %s6, %s4
  %8 = sst [smem:[#allocation2]] %s0
  %9 = sst [smem:[#allocation3]] %s1
  $region1: #{tpu_custom_call.1} parent=0
    #allocation4 [shape = 'u8[8192]{0}', space=vmem, size = 0x2000, scoped, tag = 'input window, operand 2, single buffered']
    #allocation5 [shape = 's32[1]{0}', space=sflag, size = 0x4, scoped, tag = 'scoped memory for tpu_custom_call.1']
    #allocation6 [shape = 's32[1]{0}', space=sflag, size = 0x4, scoped, tag = 'scoped memory for tpu_custom_call.1']
    #allocation7 [shape = 'u8[8192]{0}', space=vmem, size = 0x2000, scoped, tag = 'output window, operand 0, single buffered']
    %10 = vsyncpa [#allocation5], 0
    %11 = vsyncpa [#allocation6], 0
    // Predicated region
    $region2: #{tpu_custom_call.1} parent=1 // pred_check
      _
    $region3: #{tpu_custom_call.1} parent=1 // pred_check_branch
      %13 = sbr.rel (0) target = $region5
    $region4: #{tpu_custom_call.1} parent=1 // pred_region
      _
    $region5: #{tpu_custom_call.1} parent=1 // pred_fallthru
      _
    // Predicated region
    $region6: #{tpu_custom_call.1} parent=1 // pred_check
      _
    $region7: #{tpu_custom_call.1} parent=1 // pred_check_branch
      %15 = sbr.rel (0) target = $region9
    $region8: #{tpu_custom_call.1} parent=1 // pred_region
      _
    $region9: #{tpu_custom_call.1} parent=1 // pred_fallthru
      _
    // Predicated region
    $region10: #{tpu_custom_call.1} parent=1 // pred_check
      _
    $region11: #{tpu_custom_call.1} parent=1 // pred_check_branch
      %17 = sbr.rel (0) target = $region13
    $region12: #{tpu_custom_call.1} parent=1 // pred_region
      %19 = vsyncadd [#allocation5], 0
      %s21 = sshll.u32 %s2, 4
      %s22 = int_to_ptr.hbm [resolvable:$true] %s21
      %s23 = sshll.u32 [#allocation4], 4
      %s24 = int_to_ptr.vmem [resolvable:$true] %s23
      %26 = dma.hbm_to_vmem [thread:$0]  %s22, 256, %s24, [#allocation5]
    $region13: #{tpu_custom_call.1} parent=1 // pred_fallthru
      _
    // Predicated region
    $region14: #{tpu_custom_call.1} parent=1 // pred_check
      _
    $region15: #{tpu_custom_call.1} parent=1 // pred_check_branch
      %28 = sbr.rel (0) target = $region17
    $region16: #{tpu_custom_call.1} parent=1 // pred_region
      %30 = dma.done [#allocation5], 256
    $region17: #{tpu_custom_call.1} parent=1 // pred_fallthru
      _
    %v31 = vlaneseq
    %v32 = vshrl.u32 %v31, 7
    %v33 = vlaneseq
    %v34 = vand.u32 %v33, 127
    %v35 = vadd.s32 %v34, 128
    %v36 = vadd.s32 %v34, 256
    %v37 = vadd.s32 %v34, 384
    %v38 = vadd.s32 %v34, 512
    %v39 = vadd.s32 %v34, 640
    %v40 = vadd.s32 %v34, 768
    %v41 = vadd.s32 %v34, 896
    %v42 = vmul.u32 %v32, 1024
    %v43 = vadd.s32 %v42, %v34
    %v44 = vadd.s32 %v42, %v35
    %v45 = vadd.s32 %v42, %v36
    %v46 = vadd.s32 %v42, %v37
    %v47 = vadd.s32 %v42, %v38
    %v48 = vadd.s32 %v42, %v39
    %v49 = vadd.s32 %v42, %v40
    %v50 = vadd.s32 %v42, %v41
    %s51 = sld [smem:[#allocation2]]
    %s52 = smul.u32 %s51, 2654435769
    %s53 = smul.u32 0, 2048
    %s54 = sadd.s32 %s52, %s53
    %s55 = sadd.s32 %s54, 2135587861
    %v56 = vstv %s55
    %v57 = vadd.s32 %v43, %v56
    %v58 = vadd.s32 %v44, %v56
    %v59 = vadd.s32 %v45, %v56
    %v60 = vadd.s32 %v46, %v56
    %v61 = vadd.s32 %v47, %v56
    %v62 = vadd.s32 %v48, %v56
    %v63 = vadd.s32 %v49, %v56
    %v64 = vadd.s32 %v50, %v56
    %v65 = vshrl.u32 %v57, 16
    %v66 = vshrl.u32 %v58, 16
    %v67 = vshrl.u32 %v59, 16
    %v68 = vshrl.u32 %v60, 16
    %v69 = vshrl.u32 %v61, 16
    %v70 = vshrl.u32 %v62, 16
    %v71 = vshrl.u32 %v63, 16
    %v72 = vshrl.u32 %v64, 16
    %v73 = vxor.u32 %v57, %v65
    %v74 = vxor.u32 %v58, %v66
    %v75 = vxor.u32 %v59, %v67
    %v76 = vxor.u32 %v60, %v68
    %v77 = vxor.u32 %v61, %v69
    %v78 = vxor.u32 %v62, %v70
    %v79 = vxor.u32 %v63, %v71
    %v80 = vxor.u32 %v64, %v72
    %v81 = vmul.u32 %v73, 2246822507
    %v82 = vmul.u32 %v74, 2246822507
    %v83 = vmul.u32 %v75, 2246822507
    %v84 = vmul.u32 %v76, 2246822507
    %v85 = vmul.u32 %v77, 2246822507
    %v86 = vmul.u32 %v78, 2246822507
    %v87 = vmul.u32 %v79, 2246822507
    %v88 = vmul.u32 %v80, 2246822507
    %v89 = vshrl.u32 %v81, 13
    %v90 = vshrl.u32 %v82, 13
    %v91 = vshrl.u32 %v83, 13
    %v92 = vshrl.u32 %v84, 13
    %v93 = vshrl.u32 %v85, 13
    %v94 = vshrl.u32 %v86, 13
    %v95 = vshrl.u32 %v87, 13
    %v96 = vshrl.u32 %v88, 13
    %v97 = vxor.u32 %v81, %v89
    %v98 = vxor.u32 %v82, %v90
    %v99 = vxor.u32 %v83, %v91
    %v100 = vxor.u32 %v84, %v92
    %v101 = vxor.u32 %v85, %v93
    %v102 = vxor.u32 %v86, %v94
    %v103 = vxor.u32 %v87, %v95
    %v104 = vxor.u32 %v88, %v96
    %v105 = vmul.u32 %v97, 3266489909
    %v106 = vmul.u32 %v98, 3266489909
    %v107 = vmul.u32 %v99, 3266489909
    %v108 = vmul.u32 %v100, 3266489909
    %v109 = vmul.u32 %v101, 3266489909
    %v110 = vmul.u32 %v102, 3266489909
    %v111 = vmul.u32 %v103, 3266489909
    %v112 = vmul.u32 %v104, 3266489909
    %v113 = vshrl.u32 %v105, 16
    %v114 = vshrl.u32 %v106, 16
    %v115 = vshrl.u32 %v107, 16
    %v116 = vshrl.u32 %v108, 16
    %v117 = vshrl.u32 %v109, 16
    %v118 = vshrl.u32 %v110, 16
    %v119 = vshrl.u32 %v111, 16
    %v120 = vshrl.u32 %v112, 16
    %v121 = vxor.u32 %v105, %v113
    %v122 = vxor.u32 %v106, %v114
    %v123 = vxor.u32 %v107, %v115
    %v124 = vxor.u32 %v108, %v116
    %v125 = vxor.u32 %v109, %v117
    %v126 = vxor.u32 %v110, %v118
    %v127 = vxor.u32 %v111, %v119
    %v128 = vxor.u32 %v112, %v120
    %v129 = vshrl.u32 %v121, 9
    %v130 = vshrl.u32 %v122, 9
    %v131 = vshrl.u32 %v123, 9
    %v132 = vshrl.u32 %v124, 9
    %v133 = vshrl.u32 %v125, 9
    %v134 = vshrl.u32 %v126, 9
    %v135 = vshrl.u32 %v127, 9
    %v136 = vshrl.u32 %v128, 9
    %v137 = vcvt.s32.f32 %v129
    %v138 = vcvt.s32.f32 %v130
    %v139 = vcvt.s32.f32 %v131
    %v140 = vcvt.s32.f32 %v132
    %v141 = vcvt.s32.f32 %v133
    %v142 = vcvt.s32.f32 %v134
    %v143 = vcvt.s32.f32 %v135
    %v144 = vcvt.s32.f32 %v136
    %v145 = vadd.f32 %v137, 0.5
    %v146 = vadd.f32 %v138, 0.5
    %v147 = vadd.f32 %v139, 0.5
    %v148 = vadd.f32 %v140, 0.5
    %v149 = vadd.f32 %v141, 0.5
    %v150 = vadd.f32 %v142, 0.5
    %v151 = vadd.f32 %v143, 0.5
    %v152 = vadd.f32 %v144, 0.5
    %v153 = vmul.f32 %v145, 1.1920929e-07
    %v154 = vmul.f32 %v146, 1.1920929e-07
    %v155 = vmul.f32 %v147, 1.1920929e-07
    %v156 = vmul.f32 %v148, 1.1920929e-07
    %v157 = vmul.f32 %v149, 1.1920929e-07
    %v158 = vmul.f32 %v150, 1.1920929e-07
    %v159 = vmul.f32 %v151, 1.1920929e-07
    %v160 = vmul.f32 %v152, 1.1920929e-07
    %v161 = vmul.f32 %v153, 2.0
    %v162 = vmul.f32 %v154, 2.0
    %v163 = vmul.f32 %v155, 2.0
    %v164 = vmul.f32 %v156, 2.0
    %v165 = vmul.f32 %v157, 2.0
    %v166 = vmul.f32 %v158, 2.0
    %v167 = vmul.f32 %v159, 2.0
    %v168 = vmul.f32 %v160, 2.0
    %v169 = vsub.f32 %v161, 1.0
    %v170 = vsub.f32 %v162, 1.0
    %v171 = vsub.f32 %v163, 1.0
    %v172 = vsub.f32 %v164, 1.0
    %v173 = vsub.f32 %v165, 1.0
    %v174 = vsub.f32 %v166, 1.0
    %v175 = vsub.f32 %v167, 1.0
    %v176 = vsub.f32 %v168, 1.0
    %v177 = vsub.f32 1.0, %v169
    %v178 = vsub.f32 1.0, %v170
    %v179 = vsub.f32 1.0, %v171
    %v180 = vsub.f32 1.0, %v172
    %v181 = vsub.f32 1.0, %v173
    %v182 = vsub.f32 1.0, %v174
    %v183 = vsub.f32 1.0, %v175
    %v184 = vsub.f32 1.0, %v176
    %v185 = vadd.f32 %v169, 1.0
    %v186 = vadd.f32 %v170, 1.0
    %v187 = vadd.f32 %v171, 1.0
    %v188 = vadd.f32 %v172, 1.0
    %v189 = vadd.f32 %v173, 1.0
    %v190 = vadd.f32 %v174, 1.0
    %v191 = vadd.f32 %v175, 1.0
    %v192 = vadd.f32 %v176, 1.0
    %v193 = vmul.f32 %v177, %v185
    %v194 = vmul.f32 %v178, %v186
    %v195 = vmul.f32 %v179, %v187
    %v196 = vmul.f32 %v180, %v188
    %v197 = vmul.f32 %v181, %v189
    %v198 = vmul.f32 %v182, %v190
    %v199 = vmul.f32 %v183, %v191
    %v200 = vmul.f32 %v184, %v192
    %v201 = vlog2.pop %v193
    %v202 = vmul.f32 %v201, 0.6931472
    %v203 = vlog2.pop %v194
    %v204 = vmul.f32 %v203, 0.6931472
    %v205 = vlog2.pop %v195
    %v206 = vmul.f32 %v205, 0.6931472
    %v207 = vlog2.pop %v196
    %v208 = vmul.f32 %v207, 0.6931472
    %v209 = vlog2.pop %v197
    %v210 = vmul.f32 %v209, 0.6931472
    %v211 = vlog2.pop %v198
    %v212 = vmul.f32 %v211, 0.6931472
    %v213 = vlog2.pop %v199
    %v214 = vmul.f32 %v213, 0.6931472
    %v215 = vlog2.pop %v200
    %v216 = vmul.f32 %v215, 0.6931472
    %v217 = vsub.f32 0.0, %v202
    %v218 = vsub.f32 0.0, %v204
    %v219 = vsub.f32 0.0, %v206
    %v220 = vsub.f32 0.0, %v208
    %v221 = vsub.f32 0.0, %v210
    %v222 = vsub.f32 0.0, %v212
    %v223 = vsub.f32 0.0, %v214
    %v224 = vsub.f32 0.0, %v216
    %v225 = vsub.f32 %v217, 2.5
    %v226 = vsub.f32 %v218, 2.5
    %v227 = vsub.f32 %v219, 2.5
    %v228 = vsub.f32 %v220, 2.5
    %v229 = vsub.f32 %v221, 2.5
    %v230 = vsub.f32 %v222, 2.5
    %v231 = vsub.f32 %v223, 2.5
    %v232 = vsub.f32 %v224, 2.5
    %v233 = vmul.f32 %v225, 2.8102264e-08
    %v234 = vmul.f32 %v226, 2.8102264e-08
    %v235 = vmul.f32 %v227, 2.8102264e-08
    %v236 = vmul.f32 %v228, 2.8102264e-08
    %v237 = vmul.f32 %v229, 2.8102264e-08
    %v238 = vmul.f32 %v230, 2.8102264e-08
    %v239 = vmul.f32 %v231, 2.8102264e-08
    %v240 = vmul.f32 %v232, 2.8102264e-08
    %v241 = vadd.f32 %v233, 3.4327394e-07
    %v242 = vadd.f32 %v234, 3.4327394e-07
    %v243 = vadd.f32 %v235, 3.4327394e-07
    %v244 = vadd.f32 %v236, 3.4327394e-07
    %v245 = vadd.f32 %v237, 3.4327394e-07
    %v246 = vadd.f32 %v238, 3.4327394e-07
    %v247 = vadd.f32 %v239, 3.4327394e-07
    %v248 = vadd.f32 %v240, 3.4327394e-07
    %v249 = vmul.f32 %v241, %v225
    %v250 = vmul.f32 %v242, %v226
    %v251 = vmul.f32 %v243, %v227
    %v252 = vmul.f32 %v244, %v228
    %v253 = vmul.f32 %v245, %v229
    %v254 = vmul.f32 %v246, %v230
    %v255 = vmul.f32 %v247, %v231
    %v256 = vmul.f32 %v248, %v232
    %v257 = vadd.f32 %v249, -3.5233877e-06
    %v258 = vadd.f32 %v250, -3.5233877e-06
    %v259 = vadd.f32 %v251, -3.5233877e-06
    %v260 = vadd.f32 %v252, -3.5233877e-06
    %v261 = vadd.f32 %v253, -3.5233877e-06
    %v262 = vadd.f32 %v254, -3.5233877e-06
    %v263 = vadd.f32 %v255, -3.5233877e-06
    %v264 = vadd.f32 %v256, -3.5233877e-06
    %v265 = vmul.f32 %v257, %v225
    %v266 = vmul.f32 %v258, %v226
    %v267 = vmul.f32 %v259, %v227
    %v268 = vmul.f32 %v260, %v228
    %v269 = vmul.f32 %v261, %v229
    %v270 = vmul.f32 %v262, %v230
    %v271 = vmul.f32 %v263, %v231
    %v272 = vmul.f32 %v264, %v232
    %v273 = vadd.f32 %v265, -4.3915065e-06
    %v274 = vadd.f32 %v266, -4.3915065e-06
    %v275 = vadd.f32 %v267, -4.3915065e-06
    %v276 = vadd.f32 %v268, -4.3915065e-06
    %v277 = vadd.f32 %v269, -4.3915065e-06
    %v278 = vadd.f32 %v270, -4.3915065e-06
    %v279 = vadd.f32 %v271, -4.3915065e-06
    %v280 = vadd.f32 %v272, -4.3915065e-06
    %v281 = vmul.f32 %v273, %v225
    %v282 = vmul.f32 %v274, %v226
    %v283 = vmul.f32 %v275, %v227
    %v284 = vmul.f32 %v276, %v228
    %v285 = vmul.f32 %v277, %v229
    %v286 = vmul.f32 %v278, %v230
    %v287 = vmul.f32 %v279, %v231
    %v288 = vmul.f32 %v280, %v232
    %v289 = vadd.f32 %v281, 0.00021858087
    %v290 = vadd.f32 %v282, 0.00021858087
    %v291 = vadd.f32 %v283, 0.00021858087
    %v292 = vadd.f32 %v284, 0.00021858087
    %v293 = vadd.f32 %v285, 0.00021858087
    %v294 = vadd.f32 %v286, 0.00021858087
    %v295 = vadd.f32 %v287, 0.00021858087
    %v296 = vadd.f32 %v288, 0.00021858087
    %v297 = vmul.f32 %v289, %v225
    %v298 = vmul.f32 %v290, %v226
    %v299 = vmul.f32 %v291, %v227
    %v300 = vmul.f32 %v292, %v228
    %v301 = vmul.f32 %v293, %v229
    %v302 = vmul.f32 %v294, %v230
    %v303 = vmul.f32 %v295, %v231
    %v304 = vmul.f32 %v296, %v232
    %v305 = vadd.f32 %v297, -0.001253725
    %v306 = vadd.f32 %v298, -0.001253725
    %v307 = vadd.f32 %v299, -0.001253725
    %v308 = vadd.f32 %v300, -0.001253725
    %v309 = vadd.f32 %v301, -0.001253725
    %v310 = vadd.f32 %v302, -0.001253725
    %v311 = vadd.f32 %v303, -0.001253725
    %v312 = vadd.f32 %v304, -0.001253725
    %v313 = vmul.f32 %v305, %v225
    %v314 = vmul.f32 %v306, %v226
    %v315 = vmul.f32 %v307, %v227
    %v316 = vmul.f32 %v308, %v228
    %v317 = vmul.f32 %v309, %v229
    %v318 = vmul.f32 %v310, %v230
    %v319 = vmul.f32 %v311, %v231
    %v320 = vmul.f32 %v312, %v232
    %v321 = vadd.f32 %v313, -0.0041776816
    %v322 = vadd.f32 %v314, -0.0041776816
    %v323 = vadd.f32 %v315, -0.0041776816
    %v324 = vadd.f32 %v316, -0.0041776816
    %v325 = vadd.f32 %v317, -0.0041776816
    %v326 = vadd.f32 %v318, -0.0041776816
    %v327 = vadd.f32 %v319, -0.0041776816
    %v328 = vadd.f32 %v320, -0.0041776816
    %v329 = vmul.f32 %v321, %v225
    %v330 = vmul.f32 %v322, %v226
    %v331 = vmul.f32 %v323, %v227
    %v332 = vmul.f32 %v324, %v228
    %v333 = vmul.f32 %v325, %v229
    %v334 = vmul.f32 %v326, %v230
    %v335 = vmul.f32 %v327, %v231
    %v336 = vmul.f32 %v328, %v232
    %v337 = vadd.f32 %v329, 0.24664073
    %v338 = vadd.f32 %v330, 0.24664073
    %v339 = vadd.f32 %v331, 0.24664073
    %v340 = vadd.f32 %v332, 0.24664073
    %v341 = vadd.f32 %v333, 0.24664073
    %v342 = vadd.f32 %v334, 0.24664073
    %v343 = vadd.f32 %v335, 0.24664073
    %v344 = vadd.f32 %v336, 0.24664073
    %v345 = vmul.f32 %v337, %v225
    %v346 = vmul.f32 %v338, %v226
    %v347 = vmul.f32 %v339, %v227
    %v348 = vmul.f32 %v340, %v228
    %v349 = vmul.f32 %v341, %v229
    %v350 = vmul.f32 %v342, %v230
    %v351 = vmul.f32 %v343, %v231
    %v352 = vmul.f32 %v344, %v232
    %v353 = vadd.f32 %v345, 1.5014094
    %v354 = vadd.f32 %v346, 1.5014094
    %v355 = vadd.f32 %v347, 1.5014094
    %v356 = vadd.f32 %v348, 1.5014094
    %v357 = vadd.f32 %v349, 1.5014094
    %v358 = vadd.f32 %v350, 1.5014094
    %v359 = vadd.f32 %v351, 1.5014094
    %v360 = vadd.f32 %v352, 1.5014094
    %v361 = vrsqrt.pop %v217
    %v362 = vmul.f32 %v361, %v217
    %v363 = vmul.f32 %v362, %v361
    %v364 = vmul.f32 0.5, %v363
    %v365 = vsub.f32 1.5, %v364
    %v366 = vmul.f32 %v361, %v365
    %v367 = vmul.f32 %v217, %v366
    %vm368 = vcmp.eq.f32.partialorder %v217, inf
    %v369 = vsel %vm368, %v217, %v367
    %vm370 = vcmp.eq.f32.partialorder %v217, 0.0
    %v371 = vand.u32 %v217, 2147483648
    %v372 = vsel %vm370, %v371, %v369
    %v373 = vrsqrt.pop %v218
    %v374 = vmul.f32 %v373, %v218
    %v375 = vmul.f32 %v374, %v373
    %v376 = vmul.f32 0.5, %v375
    %v377 = vsub.f32 1.5, %v376
    %v378 = vmul.f32 %v373, %v377
    %v379 = vmul.f32 %v218, %v378
    %vm380 = vcmp.eq.f32.partialorder %v218, inf
    %v381 = vsel %vm380, %v218, %v379
    %vm382 = vcmp.eq.f32.partialorder %v218, 0.0
    %v383 = vand.u32 %v218, 2147483648
    %v384 = vsel %vm382, %v383, %v381
    %v385 = vrsqrt.pop %v219
    %v386 = vmul.f32 %v385, %v219
    %v387 = vmul.f32 %v386, %v385
    %v388 = vmul.f32 0.5, %v387
    %v389 = vsub.f32 1.5, %v388
    %v390 = vmul.f32 %v385, %v389
    %v391 = vmul.f32 %v219, %v390
    %vm392 = vcmp.eq.f32.partialorder %v219, inf
    %v393 = vsel %vm392, %v219, %v391
    %vm394 = vcmp.eq.f32.partialorder %v219, 0.0
    %v395 = vand.u32 %v219, 2147483648
    %v396 = vsel %vm394, %v395, %v393
    %v397 = vrsqrt.pop %v220
    %v398 = vmul.f32 %v397, %v220
    %v399 = vmul.f32 %v398, %v397
    %v400 = vmul.f32 0.5, %v399
    %v401 = vsub.f32 1.5, %v400
    %v402 = vmul.f32 %v397, %v401
    %v403 = vmul.f32 %v220, %v402
    %vm404 = vcmp.eq.f32.partialorder %v220, inf
    %v405 = vsel %vm404, %v220, %v403
    %vm406 = vcmp.eq.f32.partialorder %v220, 0.0
    %v407 = vand.u32 %v220, 2147483648
    %v408 = vsel %vm406, %v407, %v405
    %v409 = vrsqrt.pop %v221
    %v410 = vmul.f32 %v409, %v221
    %v411 = vmul.f32 %v410, %v409
    %v412 = vmul.f32 0.5, %v411
    %v413 = vsub.f32 1.5, %v412
    %v414 = vmul.f32 %v409, %v413
    %v415 = vmul.f32 %v221, %v414
    %vm416 = vcmp.eq.f32.partialorder %v221, inf
    %v417 = vsel %vm416, %v221, %v415
    %vm418 = vcmp.eq.f32.partialorder %v221, 0.0
    %v419 = vand.u32 %v221, 2147483648
    %v420 = vsel %vm418, %v419, %v417
    %v421 = vrsqrt.pop %v222
    %v422 = vmul.f32 %v421, %v222
    %v423 = vmul.f32 %v422, %v421
    %v424 = vmul.f32 0.5, %v423
    %v425 = vsub.f32 1.5, %v424
    %v426 = vmul.f32 %v421, %v425
    %v427 = vmul.f32 %v222, %v426
    %vm428 = vcmp.eq.f32.partialorder %v222, inf
    %v429 = vsel %vm428, %v222, %v427
    %vm430 = vcmp.eq.f32.partialorder %v222, 0.0
    %v431 = vand.u32 %v222, 2147483648
    %v432 = vsel %vm430, %v431, %v429
    %v433 = vrsqrt.pop %v223
    %v434 = vmul.f32 %v433, %v223
    %v435 = vmul.f32 %v434, %v433
    %v436 = vmul.f32 0.5, %v435
    %v437 = vsub.f32 1.5, %v436
    %v438 = vmul.f32 %v433, %v437
    %v439 = vmul.f32 %v223, %v438
    %vm440 = vcmp.eq.f32.partialorder %v223, inf
    %v441 = vsel %vm440, %v223, %v439
    %vm442 = vcmp.eq.f32.partialorder %v223, 0.0
    %v443 = vand.u32 %v223, 2147483648
    %v444 = vsel %vm442, %v443, %v441
    %v445 = vrsqrt.pop %v224
    %v446 = vmul.f32 %v445, %v224
    %v447 = vmul.f32 %v446, %v445
    %v448 = vmul.f32 0.5, %v447
    %v449 = vsub.f32 1.5, %v448
    %v450 = vmul.f32 %v445, %v449
    %v451 = vmul.f32 %v224, %v450
    %vm452 = vcmp.eq.f32.partialorder %v224, inf
    %v453 = vsel %vm452, %v224, %v451
    %vm454 = vcmp.eq.f32.partialorder %v224, 0.0
    %v455 = vand.u32 %v224, 2147483648
    %v456 = vsel %vm454, %v455, %v453
    %v457 = vsub.f32 %v372, 3.0
    %v458 = vsub.f32 %v384, 3.0
    %v459 = vsub.f32 %v396, 3.0
    %v460 = vsub.f32 %v408, 3.0
    %v461 = vsub.f32 %v420, 3.0
    %v462 = vsub.f32 %v432, 3.0
    %v463 = vsub.f32 %v444, 3.0
    %v464 = vsub.f32 %v456, 3.0
    %v465 = vmul.f32 %v457, -0.00020021426
    %v466 = vmul.f32 %v458, -0.00020021426
    %v467 = vmul.f32 %v459, -0.00020021426
    %v468 = vmul.f32 %v460, -0.00020021426
    %v469 = vmul.f32 %v461, -0.00020021426
    %v470 = vmul.f32 %v462, -0.00020021426
    %v471 = vmul.f32 %v463, -0.00020021426
    %v472 = vmul.f32 %v464, -0.00020021426
    %v473 = vadd.f32 %v465, 0.00010095056
    %v474 = vadd.f32 %v466, 0.00010095056
    %v475 = vadd.f32 %v467, 0.00010095056
    %v476 = vadd.f32 %v468, 0.00010095056
    %v477 = vadd.f32 %v469, 0.00010095056
    %v478 = vadd.f32 %v470, 0.00010095056
    %v479 = vadd.f32 %v471, 0.00010095056
    %v480 = vadd.f32 %v472, 0.00010095056
    %v481 = vmul.f32 %v473, %v457
    %v482 = vmul.f32 %v474, %v458
    %v483 = vmul.f32 %v475, %v459
    %v484 = vmul.f32 %v476, %v460
    %v485 = vmul.f32 %v477, %v461
    %v486 = vmul.f32 %v478, %v462
    %v487 = vmul.f32 %v479, %v463
    %v488 = vmul.f32 %v480, %v464
    %v489 = vadd.f32 %v481, 0.0013493432
    %v490 = vadd.f32 %v482, 0.0013493432
    %v491 = vadd.f32 %v483, 0.0013493432
    %v492 = vadd.f32 %v484, 0.0013493432
    %v493 = vadd.f32 %v485, 0.0013493432
    %v494 = vadd.f32 %v486, 0.0013493432
    %v495 = vadd.f32 %v487, 0.0013493432
    %v496 = vadd.f32 %v488, 0.0013493432
    %v497 = vmul.f32 %v489, %v457
    %v498 = vmul.f32 %v490, %v458
    %v499 = vmul.f32 %v491, %v459
    %v500 = vmul.f32 %v492, %v460
    %v501 = vmul.f32 %v493, %v461
    %v502 = vmul.f32 %v494, %v462
    %v503 = vmul.f32 %v495, %v463
    %v504 = vmul.f32 %v496, %v464
    %v505 = vadd.f32 %v497, -0.0036734284
    %v506 = vadd.f32 %v498, -0.0036734284
    %v507 = vadd.f32 %v499, -0.0036734284
    %v508 = vadd.f32 %v500, -0.0036734284
    %v509 = vadd.f32 %v501, -0.0036734284
    %v510 = vadd.f32 %v502, -0.0036734284
    %v511 = vadd.f32 %v503, -0.0036734284
    %v512 = vadd.f32 %v504, -0.0036734284
    %v513 = vmul.f32 %v505, %v457
    %v514 = vmul.f32 %v506, %v458
    %v515 = vmul.f32 %v507, %v459
    %v516 = vmul.f32 %v508, %v460
    %v517 = vmul.f32 %v509, %v461
    %v518 = vmul.f32 %v510, %v462
    %v519 = vmul.f32 %v511, %v463
    %v520 = vmul.f32 %v512, %v464
    %v521 = vadd.f32 %v513, 0.0057395077
    %v522 = vadd.f32 %v514, 0.0057395077
    %v523 = vadd.f32 %v515, 0.0057395077
    %v524 = vadd.f32 %v516, 0.0057395077
    %v525 = vadd.f32 %v517, 0.0057395077
    %v526 = vadd.f32 %v518, 0.0057395077
    %v527 = vadd.f32 %v519, 0.0057395077
    %v528 = vadd.f32 %v520, 0.0057395077
    %v529 = vmul.f32 %v521, %v457
    %v530 = vmul.f32 %v522, %v458
    %v531 = vmul.f32 %v523, %v459
    %v532 = vmul.f32 %v524, %v460
    %v533 = vmul.f32 %v525, %v461
    %v534 = vmul.f32 %v526, %v462
    %v535 = vmul.f32 %v527, %v463
    %v536 = vmul.f32 %v528, %v464
    %v537 = vadd.f32 %v529, -0.0076224613
    %v538 = vadd.f32 %v530, -0.0076224613
    %v539 = vadd.f32 %v531, -0.0076224613
    %v540 = vadd.f32 %v532, -0.0076224613
    %v541 = vadd.f32 %v533, -0.0076224613
    %v542 = vadd.f32 %v534, -0.0076224613
    %v543 = vadd.f32 %v535, -0.0076224613
    %v544 = vadd.f32 %v536, -0.0076224613
    %v545 = vmul.f32 %v537, %v457
    %v546 = vmul.f32 %v538, %v458
    %v547 = vmul.f32 %v539, %v459
    %v548 = vmul.f32 %v540, %v460
    %v549 = vmul.f32 %v541, %v461
    %v550 = vmul.f32 %v542, %v462
    %v551 = vmul.f32 %v543, %v463
    %v552 = vmul.f32 %v544, %v464
    %v553 = vadd.f32 %v545, 0.0094388705
    %v554 = vadd.f32 %v546, 0.0094388705
    %v555 = vadd.f32 %v547, 0.0094388705
    %v556 = vadd.f32 %v548, 0.0094388705
    %v557 = vadd.f32 %v549, 0.0094388705
    %v558 = vadd.f32 %v550, 0.0094388705
    %v559 = vadd.f32 %v551, 0.0094388705
    %v560 = vadd.f32 %v552, 0.0094388705
    %v561 = vmul.f32 %v553, %v457
    %v562 = vmul.f32 %v554, %v458
    %v563 = vmul.f32 %v555, %v459
    %v564 = vmul.f32 %v556, %v460
    %v565 = vmul.f32 %v557, %v461
    %v566 = vmul.f32 %v558, %v462
    %v567 = vmul.f32 %v559, %v463
    %v568 = vmul.f32 %v560, %v464
    %v569 = vadd.f32 %v561, 1.001674
    %v570 = vadd.f32 %v562, 1.001674
    %v571 = vadd.f32 %v563, 1.001674
    %v572 = vadd.f32 %v564, 1.001674
    %v573 = vadd.f32 %v565, 1.001674
    %v574 = vadd.f32 %v566, 1.001674
    %v575 = vadd.f32 %v567, 1.001674
    %v576 = vadd.f32 %v568, 1.001674
    %v577 = vmul.f32 %v569, %v457
    %v578 = vmul.f32 %v570, %v458
    %v579 = vmul.f32 %v571, %v459
    %v580 = vmul.f32 %v572, %v460
    %v581 = vmul.f32 %v573, %v461
    %v582 = vmul.f32 %v574, %v462
    %v583 = vmul.f32 %v575, %v463
    %v584 = vmul.f32 %v576, %v464
    %v585 = vadd.f32 %v577, 2.8329768
    %v586 = vadd.f32 %v578, 2.8329768
    %v587 = vadd.f32 %v579, 2.8329768
    %v588 = vadd.f32 %v580, 2.8329768
    %v589 = vadd.f32 %v581, 2.8329768
    %v590 = vadd.f32 %v582, 2.8329768
    %v591 = vadd.f32 %v583, 2.8329768
    %v592 = vadd.f32 %v584, 2.8329768
    %vm593 = vcmp.lt.f32.partialorder %v217, 5.0
    %vm594 = vcmp.lt.f32.partialorder %v218, 5.0
    %vm595 = vcmp.lt.f32.partialorder %v219, 5.0
    %vm596 = vcmp.lt.f32.partialorder %v220, 5.0
    %vm597 = vcmp.lt.f32.partialorder %v221, 5.0
    %vm598 = vcmp.lt.f32.partialorder %v222, 5.0
    %vm599 = vcmp.lt.f32.partialorder %v223, 5.0
    %vm600 = vcmp.lt.f32.partialorder %v224, 5.0
    %v601 = vsel %vm593, %v353, %v585
    %v602 = vsel %vm594, %v354, %v586
    %v603 = vsel %vm595, %v355, %v587
    %v604 = vsel %vm596, %v356, %v588
    %v605 = vsel %vm597, %v357, %v589
    %v606 = vsel %vm598, %v358, %v590
    %v607 = vsel %vm599, %v359, %v591
    %v608 = vsel %vm600, %v360, %v592
    %v609 = vmul.f32 %v601, %v169
    %v610 = vmul.f32 %v602, %v170
    %v611 = vmul.f32 %v603, %v171
    %v612 = vmul.f32 %v604, %v172
    %v613 = vmul.f32 %v605, %v173
    %v614 = vmul.f32 %v606, %v174
    %v615 = vmul.f32 %v607, %v175
    %v616 = vmul.f32 %v608, %v176
    %v617 = vmul.f32 %v609, 1.4142135
    %v618 = vmul.f32 %v610, 1.4142135
    %v619 = vmul.f32 %v611, 1.4142135
    %v620 = vmul.f32 %v612, 1.4142135
    %v621 = vmul.f32 %v613, 1.4142135
    %v622 = vmul.f32 %v614, 1.4142135
    %v623 = vmul.f32 %v615, 1.4142135
    %v624 = vmul.f32 %v616, 1.4142135
    %s625 = sld [smem:[#allocation3]]
    %v626 = vld [vmem:[#allocation4] sm:$0xff]
    %v627 = vld [vmem:[#allocation4 + $0x8] sm:$0xff]
    %v628 = vstv %s625
    %v629 = vmul.f32 %v617, %v628
    %v630 = vmul.f32 %v618, %v628
    %v631 = vmul.f32 %v619, %v628
    %v632 = vmul.f32 %v620, %v628
    %v633 = vmul.f32 %v621, %v628
    %v634 = vmul.f32 %v622, %v628
    %v635 = vmul.f32 %v623, %v628
    %v636 = vmul.f32 %v624, %v628
    %v645 = vrot.slane %v630, 6
    %v646 = vrot.slane %v631, 4
    %v647 = vrot.slane %v632, 2
    %v648 = vrot.slane %v634, 6
    %v649 = vrot.slane %v635, 4
    %v650 = vrot.slane %v636, 2
    %vm651 = vcmask 1041408
    %v652 = vsel %vm651, %v629, %v645
    %vm653 = vcmask 1045508
    %v654 = vsel %vm653, %v646, %v647
    %vm655 = vcmask 1043456
    %v656 = vsel %vm655, %v652, %v654
    %v657 = vsel %vm651, %v633, %v648
    %v658 = vsel %vm653, %v649, %v650
    %v659 = vsel %vm655, %v657, %v658
    %v662 = vadd.f32 %v626, %v656
    %v663 = vadd.f32 %v627, %v659
    %664 = vst [vmem:[#allocation7] sm:$0xff] %v662
    %665 = vst [vmem:[#allocation7 + $0x8] sm:$0xff] %v663
    // Predicated region
    $region18: #{tpu_custom_call.1} parent=1 // pred_check
      _
    $region19: #{tpu_custom_call.1} parent=1 // pred_check_branch
      %667 = sbr.rel (0) target = $region21
    $region20: #{tpu_custom_call.1} parent=1 // pred_region
      %669 = vsyncadd [#allocation6], 0
      %s671 = sshll.u32 [#allocation7], 4
      %s672 = int_to_ptr.vmem [resolvable:$true] %s671
      %s673 = sshll.u32 %s3, 4
      %s674 = int_to_ptr.hbm [resolvable:$true] %s673
      %676 = dma.vmem_to_hbm [thread:$0]  %s672, 256, %s674, [#allocation6]
    $region21: #{tpu_custom_call.1} parent=1 // pred_fallthru
      _
    // Predicated region
    $region22: #{tpu_custom_call.1} parent=1 // pred_check
      _
    $region23: #{tpu_custom_call.1} parent=1 // pred_check_branch
      %678 = sbr.rel (0) target = $region25
    $region24: #{tpu_custom_call.1} parent=1 // pred_region
      %680 = dma.done [#allocation6], 256
    $region25: #{tpu_custom_call.1} parent=1 // pred_fallthru
      _
    %681 = vsyncpa [#allocation5], 1
    %682 = vsyncpa [#allocation6], 1

</llo_original>
